<compile_context>
chip_gen: v6e
topology: v6e:2x2x1
jax: 0.10.0
libtpu: 0.0.40
codegen_flags: <defaults>
</compile_context>

<pallas_src>
import functools

import jax
import jax.numpy as jnp
from jax.experimental import pallas as pl
from jax.experimental.pallas import tpu as pltpu


def _round_up(x, m):
    return ((x + m - 1) // m) * m


def _detect_num_tensorcores():
    """v7x has 2 TensorCores per chip; v5e/v6e have 1. Heuristic, overridable."""
    try:
        kind = jax.devices()[0].device_kind.lower()
    except Exception:
        return 1
    return 2 if "v7" in kind else 1


def _mlp_kernel(x_ref, w1_ref, b1_ref, w2_ref, b2_ref, w3_ref, b3_ref, o_ref):
    # Three MXU matmuls (f32 accumulation) + VPU bias/ReLU, fully fused in VMEM.
    cdt = w1_ref.dtype  # compute dtype of the matmul operands (bf16 or f32)
    x = x_ref[...]
    h1 = jnp.dot(x, w1_ref[...], preferred_element_type=jnp.float32) + b1_ref[...]
    h1 = jnp.maximum(h1, 0.0).astype(cdt)          # ReLU in f32, cheap repack to cdt
    h2 = jnp.dot(h1, w2_ref[...], preferred_element_type=jnp.float32) + b2_ref[...]
    h2 = jnp.maximum(h2, 0.0).astype(cdt)
    out = jnp.dot(h2, w3_ref[...], preferred_element_type=jnp.float32) + b3_ref[...]
    o_ref[...] = out.astype(o_ref.dtype)


def prepare_params(params, compute_dtype=jnp.bfloat16):
    """One-time weight prep (hoisted out of the per-call wrapper).

    Weights are expected in (in, out) layout; a PyTorch nn.Linear.weight is
    (out, in) and must be transposed when importing a checkpoint.
    Biases stay f32 (they feed the f32 accumulator / VPU path).
    """
    return {
        "w1": params["w1"].astype(compute_dtype),
        "b1": params["b1"].astype(jnp.float32).reshape(1, -1),
        "w2": params["w2"].astype(compute_dtype),
        "b2": params["b2"].astype(jnp.float32).reshape(1, -1),
        "w3": params["w3"].astype(compute_dtype),
        "b3": params["b3"].astype(jnp.float32).reshape(1, -1),
    }


def policy_network_forward(x, prepared, *, batch_tile_cap=2048, num_cores=None,
                           vmem_budget_bytes=12 << 20):
    """x: (B, input_dim) float32. prepared: output of prepare_params()."""
    B, d_in = x.shape
    w1, b1 = prepared["w1"], prepared["b1"]
    w2, b2 = prepared["w2"], prepared["b2"]
    w3, b3 = prepared["w3"], prepared["b3"]
    cdt = w1.dtype
    hidden = w1.shape[1]
    d_out = w3.shape[1]
    assert w1.shape[0] == d_in, "w1 must be (input_dim, hidden) — transpose torch weights"
    assert hidden % 128 == 0, "hidden_dim should be a multiple of 128 on TPU"

    if num_cores is None:
        num_cores = _detect_num_tensorcores()
    itemsize = jnp.dtype(cdt).itemsize

    # --- Batch tiling: as few, as large steps as possible.
    #   * 1-TC chips (v5e/v6e): a single grid step when it fits VMEM.
    #   * v7x: num_cores equal "parallel" steps so the batch shards across both TCs.
    B8 = _round_up(max(B, 1), 8)
    tb = _round_up(-(-B8 // num_cores), 8)            # ceil-div, sublane aligned
    tb = min(tb, batch_tile_cap)
    # Cap the tile by a per-step VMEM footprint that fits every generation's
    # scoped-VMEM defaults (x/out double-buffered + f32/cdt intermediates + weights).
    per_row_bytes = 2 * d_in * itemsize + 2 * d_out * 4 + 2 * hidden * (4 + itemsize)
    w_bytes = ((d_in * hidden + hidden * hidden + hidden * d_out) * itemsize
               + (2 * hidden + d_out) * 4)
    tb_budget = max(8, ((vmem_budget_bytes - w_bytes) // per_row_bytes) // 8 * 8)
    tb = max(8, min(tb, tb_budget))

    B_p = _round_up(B8, tb)
    grid = (B_p // tb,)

    # Only x is touched per call: cast to the compute dtype, pad batch if needed.
    x_c = x.astype(cdt)
    if B_p != B:
        x_c = jnp.zeros((B_p, d_in), cdt).at[:B].set(x_c)

    flops = 2 * B_p * (d_in * hidden + hidden * hidden + hidden * d_out)
    bytes_accessed = B_p * d_in * itemsize + w_bytes + B_p * d_out * 4
    cost = pl.CostEstimate(flops=flops, transcendentals=0,
                           bytes_accessed=bytes_accessed)

    footprint = tb * per_row_bytes + w_bytes
    vmem_limit = int(min(64 << 20, max(32 << 20, 2 * footprint)))

    out_p = pl.pallas_call(
        _mlp_kernel,
        out_shape=jax.ShapeDtypeStruct((B_p, d_out), jnp.float32),
        grid_spec=pltpu.PrefetchScalarGridSpec(
            num_scalar_prefetch=0,
            grid=grid,
            in_specs=[
                pl.BlockSpec((tb, d_in), lambda i: (i, 0)),        # x batch tile
                pl.BlockSpec((d_in, hidden), lambda i: (0, 0)),    # w1 (VMEM-resident)
                pl.BlockSpec((1, hidden), lambda i: (0, 0)),       # b1
                pl.BlockSpec((hidden, hidden), lambda i: (0, 0)),  # w2 (VMEM-resident)
                pl.BlockSpec((1, hidden), lambda i: (0, 0)),       # b2
                pl.BlockSpec((hidden, d_out), lambda i: (0, 0)),   # w3 (VMEM-resident)
                pl.BlockSpec((1, d_out), lambda i: (0, 0)),        # b3
            ],
            out_specs=pl.BlockSpec((tb, d_out), lambda i: (i, 0)),
        ),
        compiler_params=pltpu.CompilerParams(
            dimension_semantics=("parallel",),
            vmem_limit_bytes=vmem_limit,
        ),
        cost_estimate=cost,
    )(x_c, w1, b1, w2, b2, w3, b3)

    # Strip batch padding (rows B..B_p-1 hold ReLU(bias) garbage; never reduced over).
    return out_p if B_p == B else out_p[:B]


def init_policy_network_params(key, input_dim, output_dim, hidden_dim=256):
    # Matches nn.init.uniform_(weight/bias, a=-0.001, b=0.001) deterministically.
    ks = jax.random.split(key, 6)
    u = functools.partial(jax.random.uniform, minval=-0.001, maxval=0.001,
                          dtype=jnp.float32)
    return {
        "w1": u(ks[0], (input_dim, hidden_dim)),
        "b1": u(ks[1], (1, hidden_dim)),
        "w2": u(ks[2], (hidden_dim, hidden_dim)),
        "b2": u(ks[3], (hidden_dim, hidden_dim))[0:1] * 0 + u(ks[3], (1, hidden_dim)),
        "w3": u(ks[4], (hidden_dim, output_dim)),
        "b3": u(ks[5], (1, output_dim)),
    }


def _reference_forward(x, p):
    h1 = jnp.maximum(x @ p["w1"] + p["b1"], 0.0)
    h2 = jnp.maximum(h1 @ p["w2"] + p["b2"], 0.0)
    return h2 @ p["w3"] + p["b3"]


if __name__ == "__main__":
    # Small but non-degenerate shapes: batch=256, input_dim=32, hidden_dim=256
    # (module default), output_dim=8.
    B, INPUT_DIM, OUTPUT_DIM, HIDDEN_DIM = 256, 32, 8, 256

    key = jax.random.PRNGKey(0)
    k_x, k_p = jax.random.split(key)
    x = jax.random.normal(k_x, (B, INPUT_DIM), dtype=jnp.float32)
    params = init_policy_network_params(k_p, INPUT_DIM, OUTPUT_DIM, HIDDEN_DIM)
    ref = _reference_forward(x, params)

    # f32 matmul-operand path (near-exact vs. reference).
    prep_f32 = prepare_params(params, compute_dtype=jnp.float32)
    out_f32 = jax.block_until_ready(policy_network_forward(x, prep_f32))
    assert out_f32.shape == (B, OUTPUT_DIM), out_f32.shape
    assert jnp.allclose(out_f32, ref, atol=1e-5, rtol=1e-5), "f32 mismatch vs reference"

    # bf16 matmul-operand path (default; native MXU dtype on v5e/v6e/v7x,
    # f32 accumulation) — not bit-exact vs. the f32 reference, loose tolerance.
    prep_bf16 = prepare_params(params)  # bf16 default
    out_bf16 = jax.block_until_ready(policy_network_forward(x, prep_bf16))
    assert out_bf16.shape == (B, OUTPUT_DIM), out_bf16.shape
    assert jnp.allclose(out_bf16, ref, atol=1e-3, rtol=1e-1), "bf16 mismatch vs reference"

    # Ragged batch (exercises the batch-pad + slice path).
    Bs = 50
    xs = x[:Bs]
    out_small = jax.block_until_ready(policy_network_forward(xs, prep_bf16))
    assert out_small.shape == (Bs, OUTPUT_DIM), out_small.shape
    assert jnp.allclose(out_small, ref[:Bs], atol=1e-3, rtol=1e-1), "ragged-batch mismatch"

    print("KERNEL_OK")
</pallas_src>

<mosaic_0001>
module attributes {stable_mosaic.version = 11 : i64} {
  func.func @_mlp_kernel(%arg0: i32, %arg1: memref<256x32xf32, #tpu.memory_space<vmem>>, %arg2: memref<32x256xf32, #tpu.memory_space<vmem>>, %arg3: memref<1x256xf32, #tpu.memory_space<vmem>>, %arg4: memref<256x256xf32, #tpu.memory_space<vmem>>, %arg5: memref<1x256xf32, #tpu.memory_space<vmem>>, %arg6: memref<256x8xf32, #tpu.memory_space<vmem>>, %arg7: memref<1x8xf32, #tpu.memory_space<vmem>>, %arg8: memref<256x8xf32, #tpu.memory_space<vmem>>) attributes {dimension_semantics = [#tpu.dimension_semantics<parallel>], iteration_bounds = array<i64: 1>, scalar_prefetch = 0 : i64, scratch_operands = 0 : i64, tpu.core_type = #tpu.core_type<tc>, window_params = [{transform_indices = @transform_0, window_bounds = array<i64: 256, 32>}, {pipeline_mode = #tpu.pipeline_mode<synchronous>, transform_indices = @transform_1, window_bounds = array<i64: 32, 256>}, {pipeline_mode = #tpu.pipeline_mode<synchronous>, transform_indices = @transform_2, window_bounds = array<i64: 1, 256>}, {pipeline_mode = #tpu.pipeline_mode<synchronous>, transform_indices = @transform_3, window_bounds = array<i64: 256, 256>}, {pipeline_mode = #tpu.pipeline_mode<synchronous>, transform_indices = @transform_4, window_bounds = array<i64: 1, 256>}, {pipeline_mode = #tpu.pipeline_mode<synchronous>, transform_indices = @transform_5, window_bounds = array<i64: 256, 8>}, {pipeline_mode = #tpu.pipeline_mode<synchronous>, transform_indices = @transform_6, window_bounds = array<i64: 1, 8>}, {transform_indices = @transform_7, window_bounds = array<i64: 256, 8>}]} {
    %c0 = arith.constant 0 : index
    %c0_0 = arith.constant 0 : index
    %0 = vector.load %arg1[%c0, %c0_0] : memref<256x32xf32, #tpu.memory_space<vmem>>, vector<256x32xf32>
    %c0_1 = arith.constant 0 : index
    %c0_2 = arith.constant 0 : index
    %1 = vector.load %arg2[%c0_1, %c0_2] : memref<32x256xf32, #tpu.memory_space<vmem>>, vector<32x256xf32>
    %cst = arith.constant dense<0.000000e+00> : vector<256x256xf32>
    %2 = tpu.matmul %0, %1, %cst {dimension_numbers = #tpu.dot_dimension_numbers<[1], [0], [0], [1], [0, 0, 1, 1], [], []>} : vector<256x32xf32>, vector<32x256xf32>, vector<256x256xf32> -> vector<256x256xf32>
    %c0_3 = arith.constant 0 : index
    %c0_4 = arith.constant 0 : index
    %3 = vector.load %arg3[%c0_3, %c0_4] : memref<1x256xf32, #tpu.memory_space<vmem>>, vector<1x256xf32>
    %4 = vector.broadcast %3 : vector<1x256xf32> to vector<256x256xf32>
    %5 = arith.addf %2, %4 : vector<256x256xf32>
    %cst_5 = arith.constant 0.000000e+00 : f32
    %6 = vector.broadcast %cst_5 : f32 to vector<256x256xf32>
    %7 = arith.maximumf %5, %6 : vector<256x256xf32>
    %c0_6 = arith.constant 0 : index
    %c0_7 = arith.constant 0 : index
    %8 = vector.load %arg4[%c0_6, %c0_7] : memref<256x256xf32, #tpu.memory_space<vmem>>, vector<256x256xf32>
    %cst_8 = arith.constant dense<0.000000e+00> : vector<256x256xf32>
    %9 = tpu.matmul %7, %8, %cst_8 {dimension_numbers = #tpu.dot_dimension_numbers<[1], [0], [0], [1], [0, 0, 1, 1], [], []>} : vector<256x256xf32>, vector<256x256xf32>, vector<256x256xf32> -> vector<256x256xf32>
    %c0_9 = arith.constant 0 : index
    %c0_10 = arith.constant 0 : index
    %10 = vector.load %arg5[%c0_9, %c0_10] : memref<1x256xf32, #tpu.memory_space<vmem>>, vector<1x256xf32>
    %11 = vector.broadcast %10 : vector<1x256xf32> to vector<256x256xf32>
    %12 = arith.addf %9, %11 : vector<256x256xf32>
    %cst_11 = arith.constant 0.000000e+00 : f32
    %13 = vector.broadcast %cst_11 : f32 to vector<256x256xf32>
    %14 = arith.maximumf %12, %13 : vector<256x256xf32>
    %c0_12 = arith.constant 0 : index
    %c0_13 = arith.constant 0 : index
    %15 = vector.load %arg6[%c0_12, %c0_13] : memref<256x8xf32, #tpu.memory_space<vmem>>, vector<256x8xf32>
    %cst_14 = arith.constant dense<0.000000e+00> : vector<256x8xf32>
    %16 = tpu.matmul %14, %15, %cst_14 {dimension_numbers = #tpu.dot_dimension_numbers<[1], [0], [0], [1], [0, 0, 1, 1], [], []>} : vector<256x256xf32>, vector<256x8xf32>, vector<256x8xf32> -> vector<256x8xf32>
    %c0_15 = arith.constant 0 : index
    %c0_16 = arith.constant 0 : index
    %17 = vector.load %arg7[%c0_15, %c0_16] : memref<1x8xf32, #tpu.memory_space<vmem>>, vector<1x8xf32>
    %18 = vector.broadcast %17 : vector<1x8xf32> to vector<256x8xf32>
    %19 = arith.addf %16, %18 : vector<256x8xf32>
    %c0_17 = arith.constant 0 : index
    %c0_18 = arith.constant 0 : index
    %20 = vector.load %arg8[%c0_17, %c0_18] : memref<256x8xf32, #tpu.memory_space<vmem>>, vector<256x8xf32>
    tpu.vector_store %arg8[%c0_17, %c0_18], %19 {strides = array<i32>} : memref<256x8xf32, #tpu.memory_space<vmem>>, vector<256x8xf32>,
    return
  }
  func.func @transform_0(%arg0: i32) -> (i32, i32) {
    %c0_i32 = arith.constant 0 : i32
    %c0_i32_0 = arith.constant 0 : i32
    return %arg0, %c0_i32 : i32, i32
  }
  func.func @transform_1(%arg0: i32) -> (i32, i32) {
    %c0_i32 = arith.constant 0 : i32
    %c0_i32_0 = arith.constant 0 : i32
    %c0_i32_1 = arith.constant 0 : i32
    return %c0_i32, %c0_i32_0 : i32, i32
  }
  func.func @transform_2(%arg0: i32) -> (i32, i32) {
    %c0_i32 = arith.constant 0 : i32
    %c0_i32_0 = arith.constant 0 : i32
    %c0_i32_1 = arith.constant 0 : i32
    return %c0_i32, %c0_i32_0 : i32, i32
  }
  func.func @transform_3(%arg0: i32) -> (i32, i32) {
    %c0_i32 = arith.constant 0 : i32
    %c0_i32_0 = arith.constant 0 : i32
    %c0_i32_1 = arith.constant 0 : i32
    return %c0_i32, %c0_i32_0 : i32, i32
  }
  func.func @transform_4(%arg0: i32) -> (i32, i32) {
    %c0_i32 = arith.constant 0 : i32
    %c0_i32_0 = arith.constant 0 : i32
    %c0_i32_1 = arith.constant 0 : i32
    return %c0_i32, %c0_i32_0 : i32, i32
  }
  func.func @transform_5(%arg0: i32) -> (i32, i32) {
    %c0_i32 = arith.constant 0 : i32
    %c0_i32_0 = arith.constant 0 : i32
    %c0_i32_1 = arith.constant 0 : i32
    return %c0_i32, %c0_i32_0 : i32, i32
  }
  func.func @transform_6(%arg0: i32) -> (i32, i32) {
    %c0_i32 = arith.constant 0 : i32
    %c0_i32_0 = arith.constant 0 : i32
    %c0_i32_1 = arith.constant 0 : i32
    return %c0_i32, %c0_i32_0 : i32, i32
  }
  func.func @transform_7(%arg0: i32) -> (i32, i32) {
    %c0_i32 = arith.constant 0 : i32
    %c0_i32_0 = arith.constant 0 : i32
    return %arg0, %c0_i32 : i32, i32
  }
}

</mosaic_0001>

<llo_original>
// kernel: tpu_custom_call.1
$region0: #{tpu_custom_call.1}
  #allocation0 [shape = 'u32[]', space=smem, size = 0x4, offset = 0x4, fixed_abs, tag = 'smem constant byte address 0x4 - core index']
  #allocation1 [shape = 'u32[144,128]{1,0:T(1,128)}', space=vmem, size = 0x12000, scoped, tag = 'internal scratch']
  %s0 = inlined_call_operand.vmem [shape: f32[256,32], index: 0, kind: input, shape index: {}]
  %s1 = inlined_call_operand.vmem [shape: f32[32,256], index: 1, kind: input, shape index: {}]
  %s2 = inlined_call_operand.vmem [shape: f32[1,256], index: 2, kind: input, shape index: {}]
  %s3 = inlined_call_operand.vmem [shape: f32[256,256], index: 3, kind: input, shape index: {}]
  %s4 = inlined_call_operand.vmem [shape: f32[1,256], index: 4, kind: input, shape index: {}]
  %s5 = inlined_call_operand.vmem [shape: f32[256,8], index: 5, kind: input, shape index: {}]
  %s6 = inlined_call_operand.vmem [shape: f32[1,8], index: 6, kind: input, shape index: {}]
  %s7 = inlined_call_operand.vmem [shape: f32[256,8], index: 7, kind: output, shape index: {}]
  %s8 = sld [smem:[#allocation0]]
  $region38: #{tpu_custom_call.1} parent=0
    _
  %s10 = ssub.s32 1, %s8
  %s11 = scalar_select 0, %s10, %s8
  // Predicated region
  $region2: #{tpu_custom_call.1} parent=0 // pred_check
    _
  $region3: #{tpu_custom_call.1} parent=0 // pred_check_branch
    %13 = sbr.rel (0) target = $region5
  $region4: #{tpu_custom_call.1} parent=0 // pred_region
    _
  $region5: #{tpu_custom_call.1} parent=0 // pred_fallthru
    _
  // Predicated region
  $region6: #{tpu_custom_call.1} parent=0 // pred_check
    _
  $region7: #{tpu_custom_call.1} parent=0 // pred_check_branch
    %15 = sbr.rel (0) target = $region9
  $region8: #{tpu_custom_call.1} parent=0 // pred_region
    _
  $region9: #{tpu_custom_call.1} parent=0 // pred_fallthru
    _
  // Predicated region
  $region10: #{tpu_custom_call.1} parent=0 // pred_check
    _
  $region11: #{tpu_custom_call.1} parent=0 // pred_check_branch
    %17 = sbr.rel (0) target = $region13
  $region12: #{tpu_custom_call.1} parent=0 // pred_region
    _
  $region13: #{tpu_custom_call.1} parent=0 // pred_fallthru
    _
  // Predicated region
  $region14: #{tpu_custom_call.1} parent=0 // pred_check
    _
  $region15: #{tpu_custom_call.1} parent=0 // pred_check_branch
    %19 = sbr.rel (0) target = $region17
  $region16: #{tpu_custom_call.1} parent=0 // pred_region
    _
  $region17: #{tpu_custom_call.1} parent=0 // pred_fallthru
    _
  // Predicated region
  $region18: #{tpu_custom_call.1} parent=0 // pred_check
    _
  $region19: #{tpu_custom_call.1} parent=0 // pred_check_branch
    %21 = sbr.rel (0) target = $region21
  $region20: #{tpu_custom_call.1} parent=0 // pred_region
    _
  $region21: #{tpu_custom_call.1} parent=0 // pred_fallthru
    _
  // Predicated region
  $region22: #{tpu_custom_call.1} parent=0 // pred_check
    _
  $region23: #{tpu_custom_call.1} parent=0 // pred_check_branch
    %23 = sbr.rel (0) target = $region25
  $region24: #{tpu_custom_call.1} parent=0 // pred_region
    _
  $region25: #{tpu_custom_call.1} parent=0 // pred_fallthru
    _
  // Predicated region
  $region26: #{tpu_custom_call.1} parent=0 // pred_check
    _
  $region27: #{tpu_custom_call.1} parent=0 // pred_check_branch
    %25 = sbr.rel (0) target = $region29
  $region28: #{tpu_custom_call.1} parent=0 // pred_region
    _
  $region29: #{tpu_custom_call.1} parent=0 // pred_fallthru
    _
  %v26 = vld [vmem:[%s0] sm:$0xff]
  %v27 = vld [vmem:[%s0 + $0x8] sm:$0xff]
  %v28 = vld [vmem:[%s0 + $0x10] sm:$0xff]
  %v29 = vld [vmem:[%s0 + $0x18] sm:$0xff]
  %v30 = vld [vmem:[%s0 + $0x20] sm:$0xff]
  %v31 = vld [vmem:[%s0 + $0x28] sm:$0xff]
  %v32 = vld [vmem:[%s0 + $0x30] sm:$0xff]
  %v33 = vld [vmem:[%s0 + $0x38] sm:$0xff]
  %v34 = vld [vmem:[%s0 + $0x40] sm:$0xff]
  %v35 = vld [vmem:[%s0 + $0x48] sm:$0xff]
  %v36 = vld [vmem:[%s0 + $0x50] sm:$0xff]
  %v37 = vld [vmem:[%s0 + $0x58] sm:$0xff]
  %v38 = vld [vmem:[%s0 + $0x60] sm:$0xff]
  %v39 = vld [vmem:[%s0 + $0x68] sm:$0xff]
  %v40 = vld [vmem:[%s0 + $0x70] sm:$0xff]
  %v41 = vld [vmem:[%s0 + $0x78] sm:$0xff]
  %v42 = vld [vmem:[%s0 + $0x80] sm:$0xff]
  %v43 = vld [vmem:[%s0 + $0x88] sm:$0xff]
  %v44 = vld [vmem:[%s0 + $0x90] sm:$0xff]
  %v45 = vld [vmem:[%s0 + $0x98] sm:$0xff]
  %v46 = vld [vmem:[%s0 + $0xa0] sm:$0xff]
  %v47 = vld [vmem:[%s0 + $0xa8] sm:$0xff]
  %v48 = vld [vmem:[%s0 + $0xb0] sm:$0xff]
  %v49 = vld [vmem:[%s0 + $0xb8] sm:$0xff]
  %v50 = vld [vmem:[%s0 + $0xc0] sm:$0xff]
  %v51 = vld [vmem:[%s0 + $0xc8] sm:$0xff]
  %v52 = vld [vmem:[%s0 + $0xd0] sm:$0xff]
  %v53 = vld [vmem:[%s0 + $0xd8] sm:$0xff]
  %v54 = vld [vmem:[%s0 + $0xe0] sm:$0xff]
  %v55 = vld [vmem:[%s0 + $0xe8] sm:$0xff]
  %v56 = vld [vmem:[%s0 + $0xf0] sm:$0xff]
  %v57 = vld [vmem:[%s0 + $0xf8] sm:$0xff]
  %v58 = vld [vmem:[%s1] sm:$0xff]
  %v59 = vld [vmem:[%s1 + $0x8] sm:$0xff]
  %v60 = vld [vmem:[%s1 + $0x10] sm:$0xff]
  %v61 = vld [vmem:[%s1 + $0x18] sm:$0xff]
  %v62 = vld [vmem:[%s1 + $0x20] sm:$0xff]
  %v63 = vld [vmem:[%s1 + $0x28] sm:$0xff]
  %v64 = vld [vmem:[%s1 + $0x30] sm:$0xff]
  %v65 = vld [vmem:[%s1 + $0x38] sm:$0xff]
  %v66 = vld [vmem:[%s2] sm:$0x3]
  %v68 = vlaneseq
  %v69 = vshrl.u32 %v68, 7
  %v70 = vsub.s32 0, %v69
  %v71 = vrot.slane %v66, %v70
  %v72 = vlaneseq
  %v73 = vshrl.u32 %v72, 7
  %v74 = vsub.s32 1, %v73
  %v75 = vrot.slane %v66, %v74
  %vm78 = vcmask 261120
  %v80 = vsel %vm78, %v26, 0
  %v83 = vsel %vm78, %v27, 0
  %v86 = vsel %vm78, %v28, 0
  %v89 = vsel %vm78, %v29, 0
  %v92 = vsel %vm78, %v30, 0
  %v95 = vsel %vm78, %v31, 0
  %v98 = vsel %vm78, %v32, 0
  %v101 = vsel %vm78, %v33, 0
  %v104 = vsel %vm78, %v34, 0
  %v107 = vsel %vm78, %v35, 0
  %v110 = vsel %vm78, %v36, 0
  %v113 = vsel %vm78, %v37, 0
  %v116 = vsel %vm78, %v38, 0
  %v119 = vsel %vm78, %v39, 0
  %v122 = vsel %vm78, %v40, 0
  %v125 = vsel %vm78, %v41, 0
  %v128 = vsel %vm78, %v42, 0
  %v131 = vsel %vm78, %v43, 0
  %v134 = vsel %vm78, %v44, 0
  %v137 = vsel %vm78, %v45, 0
  %v140 = vsel %vm78, %v46, 0
  %v143 = vsel %vm78, %v47, 0
  %v146 = vsel %vm78, %v48, 0
  %v149 = vsel %vm78, %v49, 0
  %v152 = vsel %vm78, %v50, 0
  %v155 = vsel %vm78, %v51, 0
  %v158 = vsel %vm78, %v52, 0
  %v161 = vsel %vm78, %v53, 0
  %v164 = vsel %vm78, %v54, 0
  %v167 = vsel %vm78, %v55, 0
  %v170 = vsel %vm78, %v56, 0
  %v173 = vsel %vm78, %v57, 0
  %175 = vmatprep.subr.mxu0 0.0
  %176 = vmatpush1.msra.mxu0 0.0
  %177 = vmatprep.subr.mxu0 0.0
  %178 = vmatpush1.msra.mxu0 0.0
  %179 = vmatprep.subr.mxu0 0.0
  %180 = vmatpush1.msra.mxu0 0.0
  %181 = vmatprep.subr.mxu0 0.0
  %182 = vmatpush1.msra.mxu0 0.0
  %183 = vmatprep.subr.mxu0 0.0
  %184 = vmatpush1.msra.mxu0 0.0
  %185 = vmatprep.subr.mxu0 0.0
  %186 = vmatpush1.msra.mxu0 0.0
  %187 = vmatprep.subr.mxu0 0.0
  %188 = vmatpush1.msra.mxu0 0.0
  %189 = vmatprep.subr.mxu0 0.0
  %190 = vmatpush1.msra.mxu0 0.0
  %191 = vmatprep.subr.mxu0 0.0
  %192 = vmatpush1.msra.mxu0 0.0
  %193 = vmatprep.subr.mxu0 0.0
  %194 = vmatpush1.msra.mxu0 0.0
  %195 = vmatprep.subr.mxu0 0.0
  %196 = vmatpush1.msra.mxu0 0.0
  %197 = vmatprep.subr.mxu0 0.0
  %198 = vmatpush1.msra.mxu0 0.0
  %199 = vmatprep.subr.mxu0 %v65
  %200 = vmatpush1.msra.mxu0 %v64
  %201 = vmatprep.subr.mxu0 %v63
  %202 = vmatpush1.msra.mxu0 %v62
  %203 = vmatprep.subr.mxu0 %v61
  %204 = vmatpush1.msra.mxu0 %v60
  %205 = vmatprep.subr.mxu0 %v59
  %206 = vmatpush1.msra.mxu0 %v58
  %207 = vmatprep.subr.mxu0 0.0
  %208 = vmatpush2.msra.mxu0 0.0
  %209 = vmatprep.subr.mxu0 0.0
  %210 = vmatpush2.msra.mxu0 0.0
  %211 = vmatprep.subr.mxu0 0.0
  %212 = vmatpush2.msra.mxu0 0.0
  %213 = vmatprep.subr.mxu0 0.0
  %214 = vmatpush2.msra.mxu0 0.0
  %215 = vmatprep.subr.mxu0 0.0
  %216 = vmatpush2.msra.mxu0 0.0
  %217 = vmatprep.subr.mxu0 0.0
  %218 = vmatpush2.msra.mxu0 0.0
  %219 = vmatprep.subr.mxu0 0.0
  %220 = vmatpush2.msra.mxu0 0.0
  %221 = vmatprep.subr.mxu0 0.0
  %222 = vmatpush2.msra.mxu0 0.0
  %223 = vmatprep.subr.mxu0 0.0
  %224 = vmatpush2.msra.mxu0 0.0
  %225 = vmatprep.subr.mxu0 0.0
  %226 = vmatpush2.msra.mxu0 0.0
  %227 = vmatprep.subr.mxu0 0.0
  %228 = vmatpush2.msra.mxu0 0.0
  %229 = vmatprep.subr.mxu0 0.0
  %230 = vmatpush2.msra.mxu0 0.0
  %231 = vmatprep.subr.mxu0 0.0
  %232 = vmatpush2.msra.mxu0 0.0
  %233 = vmatprep.subr.mxu0 0.0
  %234 = vmatpush2.msra.mxu0 0.0
  %235 = vmatprep.subr.mxu0 0.0
  %236 = vmatpush2.msra.mxu0 0.0
  %237 = vmatprep.subr.mxu0 0.0
  %238 = vmatpush2.msra.mxu0 0.0
  %239 = vmatprep.mubr.f32.mxu0 0.0
  %240 = vmatmul.mubr.f32.gmra.mxu0 %v80
  %v241 = vpop.f32.mrf.mxu0
  %v242 = vadd.f32 %v71, %v241
  %v243 = vpop.f32.mrf.mxu0
  %v244 = vadd.f32 %v75, %v243
  %245 = vmatprep.mubr.f32.mxu0 0.0
  %246 = vmatmul.mubr.f32.gmra.mxu0 %v83
  %v247 = vpop.f32.mrf.mxu0
  %v248 = vadd.f32 %v71, %v247
  %v249 = vpop.f32.mrf.mxu0
  %v250 = vadd.f32 %v75, %v249
  %251 = vmatprep.mubr.f32.mxu0 0.0
  %252 = vmatmul.mubr.f32.gmra.mxu0 %v86
  %v253 = vpop.f32.mrf.mxu0
  %v254 = vadd.f32 %v71, %v253
  %v255 = vpop.f32.mrf.mxu0
  %v256 = vadd.f32 %v75, %v255
  %257 = vmatprep.mubr.f32.mxu0 0.0
  %258 = vmatmul.mubr.f32.gmra.mxu0 %v89
  %v259 = vpop.f32.mrf.mxu0
  %v260 = vadd.f32 %v71, %v259
  %v261 = vpop.f32.mrf.mxu0
  %v262 = vadd.f32 %v75, %v261
  %263 = vmatprep.mubr.f32.mxu0 0.0
  %264 = vmatmul.mubr.f32.gmra.mxu0 %v92
  %v265 = vpop.f32.mrf.mxu0
  %v266 = vadd.f32 %v71, %v265
  %v267 = vpop.f32.mrf.mxu0
  %v268 = vadd.f32 %v75, %v267
  %269 = vmatprep.mubr.f32.mxu0 0.0
  %270 = vmatmul.mubr.f32.gmra.mxu0 %v95
  %v271 = vpop.f32.mrf.mxu0
  %v272 = vadd.f32 %v71, %v271
  %v273 = vpop.f32.mrf.mxu0
  %v274 = vadd.f32 %v75, %v273
  %275 = vmatprep.mubr.f32.mxu0 0.0
  %276 = vmatmul.mubr.f32.gmra.mxu0 %v98
  %v277 = vpop.f32.mrf.mxu0
  %v278 = vadd.f32 %v71, %v277
  %v279 = vpop.f32.mrf.mxu0
  %v280 = vadd.f32 %v75, %v279
  %281 = vmatprep.mubr.f32.mxu0 0.0
  %282 = vmatmul.mubr.f32.gmra.mxu0 %v101
  %v283 = vpop.f32.mrf.mxu0
  %v284 = vadd.f32 %v71, %v283
  %v285 = vpop.f32.mrf.mxu0
  %v286 = vadd.f32 %v75, %v285
  %287 = vmatprep.mubr.f32.mxu0 0.0
  %288 = vmatmul.mubr.f32.gmra.mxu0 %v104
  %v289 = vpop.f32.mrf.mxu0
  %v290 = vadd.f32 %v71, %v289
  %v291 = vpop.f32.mrf.mxu0
  %v292 = vadd.f32 %v75, %v291
  %293 = vmatprep.mubr.f32.mxu0 0.0
  %294 = vmatmul.mubr.f32.gmra.mxu0 %v107
  %v295 = vpop.f32.mrf.mxu0
  %v296 = vadd.f32 %v71, %v295
  %v297 = vpop.f32.mrf.mxu0
  %v298 = vadd.f32 %v75, %v297
  %299 = vmatprep.mubr.f32.mxu0 0.0
  %300 = vmatmul.mubr.f32.gmra.mxu0 %v110
  %v301 = vpop.f32.mrf.mxu0
  %v302 = vadd.f32 %v71, %v301
  %v303 = vpop.f32.mrf.mxu0
  %v304 = vadd.f32 %v75, %v303
  %305 = vmatprep.mubr.f32.mxu0 0.0
  %306 = vmatmul.mubr.f32.gmra.mxu0 %v113
  %v307 = vpop.f32.mrf.mxu0
  %v308 = vadd.f32 %v71, %v307
  %v309 = vpop.f32.mrf.mxu0
  %v310 = vadd.f32 %v75, %v309
  %311 = vmatprep.mubr.f32.mxu0 0.0
  %312 = vmatmul.mubr.f32.gmra.mxu0 %v116
  %v313 = vpop.f32.mrf.mxu0
  %v314 = vadd.f32 %v71, %v313
  %v315 = vpop.f32.mrf.mxu0
  %v316 = vadd.f32 %v75, %v315
  %317 = vmatprep.mubr.f32.mxu0 0.0
  %318 = vmatmul.mubr.f32.gmra.mxu0 %v119
  %v319 = vpop.f32.mrf.mxu0
  %v320 = vadd.f32 %v71, %v319
  %v321 = vpop.f32.mrf.mxu0
  %v322 = vadd.f32 %v75, %v321
  %323 = vmatprep.mubr.f32.mxu0 0.0
  %324 = vmatmul.mubr.f32.gmra.mxu0 %v122
  %v325 = vpop.f32.mrf.mxu0
  %v326 = vadd.f32 %v71, %v325
  %v327 = vpop.f32.mrf.mxu0
  %v328 = vadd.f32 %v75, %v327
  %329 = vmatprep.mubr.f32.mxu0 0.0
  %330 = vmatmul.mubr.f32.gmra.mxu0 %v125
  %v331 = vpop.f32.mrf.mxu0
  %v332 = vadd.f32 %v71, %v331
  %v333 = vpop.f32.mrf.mxu0
  %v334 = vadd.f32 %v75, %v333
  %335 = vmatprep.mubr.f32.mxu0 0.0
  %336 = vmatmul.mubr.f32.gmra.mxu0 %v128
  %v337 = vpop.f32.mrf.mxu0
  %v338 = vadd.f32 %v71, %v337
  %v339 = vpop.f32.mrf.mxu0
  %v340 = vadd.f32 %v75, %v339
  %341 = vmatprep.mubr.f32.mxu0 0.0
  %342 = vmatmul.mubr.f32.gmra.mxu0 %v131
  %v343 = vpop.f32.mrf.mxu0
  %v344 = vadd.f32 %v71, %v343
  %v345 = vpop.f32.mrf.mxu0
  %v346 = vadd.f32 %v75, %v345
  %347 = vmatprep.mubr.f32.mxu0 0.0
  %348 = vmatmul.mubr.f32.gmra.mxu0 %v134
  %v349 = vpop.f32.mrf.mxu0
  %v350 = vadd.f32 %v71, %v349
  %v351 = vpop.f32.mrf.mxu0
  %v352 = vadd.f32 %v75, %v351
  %353 = vmatprep.mubr.f32.mxu0 0.0
  %354 = vmatmul.mubr.f32.gmra.mxu0 %v137
  %v355 = vpop.f32.mrf.mxu0
  %v356 = vadd.f32 %v71, %v355
  %v357 = vpop.f32.mrf.mxu0
  %v358 = vadd.f32 %v75, %v357
  %359 = vmatprep.mubr.f32.mxu0 0.0
  %360 = vmatmul.mubr.f32.gmra.mxu0 %v140
  %v361 = vpop.f32.mrf.mxu0
  %v362 = vadd.f32 %v71, %v361
  %v363 = vpop.f32.mrf.mxu0
  %v364 = vadd.f32 %v75, %v363
  %365 = vmatprep.mubr.f32.mxu0 0.0
  %366 = vmatmul.mubr.f32.gmra.mxu0 %v143
  %v367 = vpop.f32.mrf.mxu0
  %v368 = vadd.f32 %v71, %v367
  %v369 = vpop.f32.mrf.mxu0
  %v370 = vadd.f32 %v75, %v369
  %371 = vmatprep.mubr.f32.mxu0 0.0
  %372 = vmatmul.mubr.f32.gmra.mxu0 %v146
  %v373 = vpop.f32.mrf.mxu0
  %v374 = vadd.f32 %v71, %v373
  %v375 = vpop.f32.mrf.mxu0
  %v376 = vadd.f32 %v75, %v375
  %377 = vmatprep.mubr.f32.mxu0 0.0
  %378 = vmatmul.mubr.f32.gmra.mxu0 %v149
  %v379 = vpop.f32.mrf.mxu0
  %v380 = vadd.f32 %v71, %v379
  %v381 = vpop.f32.mrf.mxu0
  %v382 = vadd.f32 %v75, %v381
  %383 = vmatprep.mubr.f32.mxu0 0.0
  %384 = vmatmul.mubr.f32.gmra.mxu0 %v152
  %v385 = vpop.f32.mrf.mxu0
  %v386 = vadd.f32 %v71, %v385
  %v387 = vpop.f32.mrf.mxu0
  %v388 = vadd.f32 %v75, %v387
  %389 = vmatprep.mubr.f32.mxu0 0.0
  %390 = vmatmul.mubr.f32.gmra.mxu0 %v155
  %v391 = vpop.f32.mrf.mxu0
  %v392 = vadd.f32 %v71, %v391
  %v393 = vpop.f32.mrf.mxu0
  %v394 = vadd.f32 %v75, %v393
  %395 = vmatprep.mubr.f32.mxu0 0.0
  %396 = vmatmul.mubr.f32.gmra.mxu0 %v158
  %v397 = vpop.f32.mrf.mxu0
  %v398 = vadd.f32 %v71, %v397
  %v399 = vpop.f32.mrf.mxu0
  %v400 = vadd.f32 %v75, %v399
  %401 = vmatprep.mubr.f32.mxu0 0.0
  %402 = vmatmul.mubr.f32.gmra.mxu0 %v161
  %v403 = vpop.f32.mrf.mxu0
  %v404 = vadd.f32 %v71, %v403
  %v405 = vpop.f32.mrf.mxu0
  %v406 = vadd.f32 %v75, %v405
  %407 = vmatprep.mubr.f32.mxu0 0.0
  %408 = vmatmul.mubr.f32.gmra.mxu0 %v164
  %v409 = vpop.f32.mrf.mxu0
  %v410 = vadd.f32 %v71, %v409
  %v411 = vpop.f32.mrf.mxu0
  %v412 = vadd.f32 %v75, %v411
  %413 = vmatprep.mubr.f32.mxu0 0.0
  %414 = vmatmul.mubr.f32.gmra.mxu0 %v167
  %v415 = vpop.f32.mrf.mxu0
  %v416 = vadd.f32 %v71, %v415
  %v417 = vpop.f32.mrf.mxu0
  %v418 = vadd.f32 %v75, %v417
  %419 = vmatprep.mubr.f32.mxu0 0.0
  %420 = vmatmul.mubr.f32.gmra.mxu0 %v170
  %v421 = vpop.f32.mrf.mxu0
  %v422 = vadd.f32 %v71, %v421
  %v423 = vpop.f32.mrf.mxu0
  %v424 = vadd.f32 %v75, %v423
  %425 = vmatprep.mubr.f32.mxu0 0.0
  %426 = vmatmul.mubr.f32.gmra.mxu0 %v173
  %v427 = vpop.f32.mrf.mxu0
  %v428 = vadd.f32 %v71, %v427
  %v429 = vpop.f32.mrf.mxu0
  %v430 = vadd.f32 %v75, %v429
  %431 = vdwg.mxu0
  %v432 = vmax.f32 %v242, 0.0
  %v433 = vmax.f32 %v244, 0.0
  %v434 = vmax.f32 %v248, 0.0
  %v435 = vmax.f32 %v250, 0.0
  %v436 = vmax.f32 %v254, 0.0
  %v437 = vmax.f32 %v256, 0.0
  %v438 = vmax.f32 %v260, 0.0
  %v439 = vmax.f32 %v262, 0.0
  %v440 = vmax.f32 %v266, 0.0
  %v441 = vmax.f32 %v268, 0.0
  %v442 = vmax.f32 %v272, 0.0
  %v443 = vmax.f32 %v274, 0.0
  %v444 = vmax.f32 %v278, 0.0
  %v445 = vmax.f32 %v280, 0.0
  %v446 = vmax.f32 %v284, 0.0
  %v447 = vmax.f32 %v286, 0.0
  %v448 = vmax.f32 %v290, 0.0
  %v449 = vmax.f32 %v292, 0.0
  %v450 = vmax.f32 %v296, 0.0
  %v451 = vmax.f32 %v298, 0.0
  %v452 = vmax.f32 %v302, 0.0
  %v453 = vmax.f32 %v304, 0.0
  %v454 = vmax.f32 %v308, 0.0
  %v455 = vmax.f32 %v310, 0.0
  %v456 = vmax.f32 %v314, 0.0
  %v457 = vmax.f32 %v316, 0.0
  %v458 = vmax.f32 %v320, 0.0
  %v459 = vmax.f32 %v322, 0.0
  %v460 = vmax.f32 %v326, 0.0
  %v461 = vmax.f32 %v328, 0.0
  %v462 = vmax.f32 %v332, 0.0
  %v463 = vmax.f32 %v334, 0.0
  %v464 = vmax.f32 %v338, 0.0
  %v465 = vmax.f32 %v340, 0.0
  %v466 = vmax.f32 %v344, 0.0
  %v467 = vmax.f32 %v346, 0.0
  %v468 = vmax.f32 %v350, 0.0
  %v469 = vmax.f32 %v352, 0.0
  %v470 = vmax.f32 %v356, 0.0
  %v471 = vmax.f32 %v358, 0.0
  %v472 = vmax.f32 %v362, 0.0
  %v473 = vmax.f32 %v364, 0.0
  %v474 = vmax.f32 %v368, 0.0
  %v475 = vmax.f32 %v370, 0.0
  %v476 = vmax.f32 %v374, 0.0
  %v477 = vmax.f32 %v376, 0.0
  %v478 = vmax.f32 %v380, 0.0
  %v479 = vmax.f32 %v382, 0.0
  %v480 = vmax.f32 %v386, 0.0
  %v481 = vmax.f32 %v388, 0.0
  %v482 = vmax.f32 %v392, 0.0
  %v483 = vmax.f32 %v394, 0.0
  %v484 = vmax.f32 %v398, 0.0
  %v485 = vmax.f32 %v400, 0.0
  %v486 = vmax.f32 %v404, 0.0
  %v487 = vmax.f32 %v406, 0.0
  %v488 = vmax.f32 %v410, 0.0
  %v489 = vmax.f32 %v412, 0.0
  %v490 = vmax.f32 %v416, 0.0
  %v491 = vmax.f32 %v418, 0.0
  %v492 = vmax.f32 %v422, 0.0
  %v493 = vmax.f32 %v424, 0.0
  %v494 = vmax.f32 %v428, 0.0
  %v495 = vmax.f32 %v430, 0.0
  %v496 = vld [vmem:[%s3] sm:$0xff]
  %v497 = vld [vmem:[%s3 + $0x8] sm:$0xff]
  %v498 = vld [vmem:[%s3 + $0x10] sm:$0xff]
  %v499 = vld [vmem:[%s3 + $0x18] sm:$0xff]
  %v500 = vld [vmem:[%s3 + $0x20] sm:$0xff]
  %v501 = vld [vmem:[%s3 + $0x28] sm:$0xff]
  %v502 = vld [vmem:[%s3 + $0x30] sm:$0xff]
  %v503 = vld [vmem:[%s3 + $0x38] sm:$0xff]
  %v504 = vld [vmem:[%s3 + $0x40] sm:$0xff]
  %v505 = vld [vmem:[%s3 + $0x48] sm:$0xff]
  %v506 = vld [vmem:[%s3 + $0x50] sm:$0xff]
  %v507 = vld [vmem:[%s3 + $0x58] sm:$0xff]
  %v508 = vld [vmem:[%s3 + $0x60] sm:$0xff]
  %v509 = vld [vmem:[%s3 + $0x68] sm:$0xff]
  %v510 = vld [vmem:[%s3 + $0x70] sm:$0xff]
  %v511 = vld [vmem:[%s3 + $0x78] sm:$0xff]
  %v512 = vld [vmem:[%s3 + $0x80] sm:$0xff]
  %v513 = vld [vmem:[%s3 + $0x88] sm:$0xff]
  %v514 = vld [vmem:[%s3 + $0x90] sm:$0xff]
  %v515 = vld [vmem:[%s3 + $0x98] sm:$0xff]
  %v516 = vld [vmem:[%s3 + $0xa0] sm:$0xff]
  %v517 = vld [vmem:[%s3 + $0xa8] sm:$0xff]
  %v518 = vld [vmem:[%s3 + $0xb0] sm:$0xff]
  %v519 = vld [vmem:[%s3 + $0xb8] sm:$0xff]
  %v520 = vld [vmem:[%s3 + $0xc0] sm:$0xff]
  %v521 = vld [vmem:[%s3 + $0xc8] sm:$0xff]
  %v522 = vld [vmem:[%s3 + $0xd0] sm:$0xff]
  %v523 = vld [vmem:[%s3 + $0xd8] sm:$0xff]
  %v524 = vld [vmem:[%s3 + $0xe0] sm:$0xff]
  %v525 = vld [vmem:[%s3 + $0xe8] sm:$0xff]
  %v526 = vld [vmem:[%s3 + $0xf0] sm:$0xff]
  %v527 = vld [vmem:[%s3 + $0xf8] sm:$0xff]
  %v528 = vld [vmem:[%s3 + $0x100] sm:$0xff]
  %v529 = vld [vmem:[%s3 + $0x108] sm:$0xff]
  %v530 = vld [vmem:[%s3 + $0x110] sm:$0xff]
  %v531 = vld [vmem:[%s3 + $0x118] sm:$0xff]
  %v532 = vld [vmem:[%s3 + $0x120] sm:$0xff]
  %v533 = vld [vmem:[%s3 + $0x128] sm:$0xff]
  %v534 = vld [vmem:[%s3 + $0x130] sm:$0xff]
  %v535 = vld [vmem:[%s3 + $0x138] sm:$0xff]
  %v536 = vld [vmem:[%s3 + $0x140] sm:$0xff]
  %v537 = vld [vmem:[%s3 + $0x148] sm:$0xff]
  %v538 = vld [vmem:[%s3 + $0x150] sm:$0xff]
  %v539 = vld [vmem:[%s3 + $0x158] sm:$0xff]
  %v540 = vld [vmem:[%s3 + $0x160] sm:$0xff]
  %v541 = vld [vmem:[%s3 + $0x168] sm:$0xff]
  %v542 = vld [vmem:[%s3 + $0x170] sm:$0xff]
  %v543 = vld [vmem:[%s3 + $0x178] sm:$0xff]
  %v544 = vld [vmem:[%s3 + $0x180] sm:$0xff]
  %v545 = vld [vmem:[%s3 + $0x188] sm:$0xff]
  %v546 = vld [vmem:[%s3 + $0x190] sm:$0xff]
  %v547 = vld [vmem:[%s3 + $0x198] sm:$0xff]
  %v548 = vld [vmem:[%s3 + $0x1a0] sm:$0xff]
  %v549 = vld [vmem:[%s3 + $0x1a8] sm:$0xff]
  %v550 = vld [vmem:[%s3 + $0x1b0] sm:$0xff]
  %v551 = vld [vmem:[%s3 + $0x1b8] sm:$0xff]
  %v552 = vld [vmem:[%s3 + $0x1c0] sm:$0xff]
  %v553 = vld [vmem:[%s3 + $0x1c8] sm:$0xff]
  %v554 = vld [vmem:[%s3 + $0x1d0] sm:$0xff]
  %v555 = vld [vmem:[%s3 + $0x1d8] sm:$0xff]
  %v556 = vld [vmem:[%s3 + $0x1e0] sm:$0xff]
  %v557 = vld [vmem:[%s3 + $0x1e8] sm:$0xff]
  %v558 = vld [vmem:[%s3 + $0x1f0] sm:$0xff]
  %v559 = vld [vmem:[%s3 + $0x1f8] sm:$0xff]
  %v560 = vld [vmem:[%s4] sm:$0x3]
  %v562 = vlaneseq
  %v563 = vshrl.u32 %v562, 7
  %v564 = vsub.s32 0, %v563
  %v565 = vrot.slane %v560, %v564
  %v566 = vlaneseq
  %v567 = vshrl.u32 %v566, 7
  %v568 = vsub.s32 1, %v567
  %v569 = vrot.slane %v560, %v568
  %572 = vmatprep.subr.mxu0 %v527
  %573 = vmatpush1.msra.mxu0 %v526
  %574 = vmatprep.subr.mxu0 %v525
  %575 = vmatpush1.msra.mxu0 %v524
  %576 = vmatprep.subr.mxu0 %v523
  %577 = vmatpush1.msra.mxu0 %v522
  %578 = vmatprep.subr.mxu0 %v521
  %579 = vmatpush1.msra.mxu0 %v520
  %580 = vmatprep.subr.mxu0 %v519
  %581 = vmatpush1.msra.mxu0 %v518
  %582 = vmatprep.subr.mxu0 %v517
  %583 = vmatpush1.msra.mxu0 %v516
  %584 = vmatprep.subr.mxu0 %v515
  %585 = vmatpush1.msra.mxu0 %v514
  %586 = vmatprep.subr.mxu0 %v513
  %587 = vmatpush1.msra.mxu0 %v512
  %588 = vmatprep.subr.mxu0 %v511
  %589 = vmatpush1.msra.mxu0 %v510
  %590 = vmatprep.subr.mxu0 %v509
  %591 = vmatpush1.msra.mxu0 %v508
  %592 = vmatprep.subr.mxu0 %v507
  %593 = vmatpush1.msra.mxu0 %v506
  %594 = vmatprep.subr.mxu0 %v505
  %595 = vmatpush1.msra.mxu0 %v504
  %596 = vmatprep.subr.mxu0 %v503
  %597 = vmatpush1.msra.mxu0 %v502
  %598 = vmatprep.subr.mxu0 %v501
  %599 = vmatpush1.msra.mxu0 %v500
  %600 = vmatprep.subr.mxu0 %v499
  %601 = vmatpush1.msra.mxu0 %v498
  %602 = vmatprep.subr.mxu0 %v497
  %603 = vmatpush1.msra.mxu0 %v496
  %604 = vmatprep.subr.mxu0 %v559
  %605 = vmatpush2.msra.mxu0 %v558
  %606 = vmatprep.subr.mxu0 %v557
  %607 = vmatpush2.msra.mxu0 %v556
  %608 = vmatprep.subr.mxu0 %v555
  %609 = vmatpush2.msra.mxu0 %v554
  %610 = vmatprep.subr.mxu0 %v553
  %611 = vmatpush2.msra.mxu0 %v552
  %612 = vmatprep.subr.mxu0 %v551
  %613 = vmatpush2.msra.mxu0 %v550
  %614 = vmatprep.subr.mxu0 %v549
  %615 = vmatpush2.msra.mxu0 %v548
  %616 = vmatprep.subr.mxu0 %v547
  %617 = vmatpush2.msra.mxu0 %v546
  %618 = vmatprep.subr.mxu0 %v545
  %619 = vmatpush2.msra.mxu0 %v544
  %620 = vmatprep.subr.mxu0 %v543
  %621 = vmatpush2.msra.mxu0 %v542
  %622 = vmatprep.subr.mxu0 %v541
  %623 = vmatpush2.msra.mxu0 %v540
  %624 = vmatprep.subr.mxu0 %v539
  %625 = vmatpush2.msra.mxu0 %v538
  %626 = vmatprep.subr.mxu0 %v537
  %627 = vmatpush2.msra.mxu0 %v536
  %628 = vmatprep.subr.mxu0 %v535
  %629 = vmatpush2.msra.mxu0 %v534
  %630 = vmatprep.subr.mxu0 %v533
  %631 = vmatpush2.msra.mxu0 %v532
  %632 = vmatprep.subr.mxu0 %v531
  %633 = vmatpush2.msra.mxu0 %v530
  %634 = vmatprep.subr.mxu0 %v529
  %635 = vmatpush2.msra.mxu0 %v528
  %636 = vmatprep.mubr.f32.mxu0 %v433
  %637 = vmatmul.mubr.f32.gmra.mxu0 %v432
  %v638 = vpop.f32.mrf.mxu0
  %v639 = vadd.f32 %v565, %v638
  %v640 = vpop.f32.mrf.mxu0
  %v641 = vadd.f32 %v569, %v640
  %642 = vmatprep.mubr.f32.mxu0 %v435
  %643 = vmatmul.mubr.f32.gmra.mxu0 %v434
  %v644 = vpop.f32.mrf.mxu0
  %v645 = vadd.f32 %v565, %v644
  %v646 = vpop.f32.mrf.mxu0
  %v647 = vadd.f32 %v569, %v646
  %648 = vmatprep.mubr.f32.mxu0 %v437
  %649 = vmatmul.mubr.f32.gmra.mxu0 %v436
  %v650 = vpop.f32.mrf.mxu0
  %v651 = vadd.f32 %v565, %v650
  %v652 = vpop.f32.mrf.mxu0
  %v653 = vadd.f32 %v569, %v652
  %654 = vmatprep.mubr.f32.mxu0 %v439
  %655 = vmatmul.mubr.f32.gmra.mxu0 %v438
  %v656 = vpop.f32.mrf.mxu0
  %v657 = vadd.f32 %v565, %v656
  %v658 = vpop.f32.mrf.mxu0
  %v659 = vadd.f32 %v569, %v658
  %660 = vmatprep.mubr.f32.mxu0 %v441
  %661 = vmatmul.mubr.f32.gmra.mxu0 %v440
  %v662 = vpop.f32.mrf.mxu0
  %v663 = vadd.f32 %v565, %v662
  %v664 = vpop.f32.mrf.mxu0
  %v665 = vadd.f32 %v569, %v664
  %666 = vmatprep.mubr.f32.mxu0 %v443
  %667 = vmatmul.mubr.f32.gmra.mxu0 %v442
  %v668 = vpop.f32.mrf.mxu0
  %v669 = vadd.f32 %v565, %v668
  %v670 = vpop.f32.mrf.mxu0
  %v671 = vadd.f32 %v569, %v670
  %672 = vmatprep.mubr.f32.mxu0 %v445
  %673 = vmatmul.mubr.f32.gmra.mxu0 %v444
  %v674 = vpop.f32.mrf.mxu0
  %v675 = vadd.f32 %v565, %v674
  %v676 = vpop.f32.mrf.mxu0
  %v677 = vadd.f32 %v569, %v676
  %678 = vmatprep.mubr.f32.mxu0 %v447
  %679 = vmatmul.mubr.f32.gmra.mxu0 %v446
  %v680 = vpop.f32.mrf.mxu0
  %v681 = vadd.f32 %v565, %v680
  %v682 = vpop.f32.mrf.mxu0
  %v683 = vadd.f32 %v569, %v682
  %684 = vmatprep.mubr.f32.mxu0 %v449
  %685 = vmatmul.mubr.f32.gmra.mxu0 %v448
  %v686 = vpop.f32.mrf.mxu0
  %v687 = vadd.f32 %v565, %v686
  %v688 = vpop.f32.mrf.mxu0
  %v689 = vadd.f32 %v569, %v688
  %690 = vmatprep.mubr.f32.mxu0 %v451
  %691 = vmatmul.mubr.f32.gmra.mxu0 %v450
  %v692 = vpop.f32.mrf.mxu0
  %v693 = vadd.f32 %v565, %v692
  %v694 = vpop.f32.mrf.mxu0
  %v695 = vadd.f32 %v569, %v694
  %696 = vmatprep.mubr.f32.mxu0 %v453
  %697 = vmatmul.mubr.f32.gmra.mxu0 %v452
  %v698 = vpop.f32.mrf.mxu0
  %v699 = vadd.f32 %v565, %v698
  %v700 = vpop.f32.mrf.mxu0
  %v701 = vadd.f32 %v569, %v700
  %702 = vmatprep.mubr.f32.mxu0 %v455
  %703 = vmatmul.mubr.f32.gmra.mxu0 %v454
  %v704 = vpop.f32.mrf.mxu0
  %v705 = vadd.f32 %v565, %v704
  %v706 = vpop.f32.mrf.mxu0
  %v707 = vadd.f32 %v569, %v706
  %708 = vmatprep.mubr.f32.mxu0 %v457
  %709 = vmatmul.mubr.f32.gmra.mxu0 %v456
  %v710 = vpop.f32.mrf.mxu0
  %v711 = vadd.f32 %v565, %v710
  %v712 = vpop.f32.mrf.mxu0
  %v713 = vadd.f32 %v569, %v712
  %714 = vmatprep.mubr.f32.mxu0 %v459
  %715 = vmatmul.mubr.f32.gmra.mxu0 %v458
  %v716 = vpop.f32.mrf.mxu0
  %v717 = vadd.f32 %v565, %v716
  %v718 = vpop.f32.mrf.mxu0
  %v719 = vadd.f32 %v569, %v718
  %720 = vmatprep.mubr.f32.mxu0 %v461
  %721 = vmatmul.mubr.f32.gmra.mxu0 %v460
  %v722 = vpop.f32.mrf.mxu0
  %v723 = vadd.f32 %v565, %v722
  %v724 = vpop.f32.mrf.mxu0
  %v725 = vadd.f32 %v569, %v724
  %726 = vmatprep.mubr.f32.mxu0 %v463
  %727 = vmatmul.mubr.f32.gmra.mxu0 %v462
  %v728 = vpop.f32.mrf.mxu0
  %v729 = vadd.f32 %v565, %v728
  %v730 = vpop.f32.mrf.mxu0
  %v731 = vadd.f32 %v569, %v730
  %732 = vmatprep.mubr.f32.mxu0 %v465
  %733 = vmatmul.mubr.f32.gmra.mxu0 %v464
  %v734 = vpop.f32.mrf.mxu0
  %v735 = vadd.f32 %v565, %v734
  %v736 = vpop.f32.mrf.mxu0
  %v737 = vadd.f32 %v569, %v736
  %738 = vmatprep.mubr.f32.mxu0 %v467
  %739 = vmatmul.mubr.f32.gmra.mxu0 %v466
  %v740 = vpop.f32.mrf.mxu0
  %v741 = vadd.f32 %v565, %v740
  %v742 = vpop.f32.mrf.mxu0
  %v743 = vadd.f32 %v569, %v742
  %744 = vmatprep.mubr.f32.mxu0 %v469
  %745 = vmatmul.mubr.f32.gmra.mxu0 %v468
  %v746 = vpop.f32.mrf.mxu0
  %v747 = vadd.f32 %v565, %v746
  %v748 = vpop.f32.mrf.mxu0
  %v749 = vadd.f32 %v569, %v748
  %750 = vmatprep.mubr.f32.mxu0 %v471
  %751 = vmatmul.mubr.f32.gmra.mxu0 %v470
  %v752 = vpop.f32.mrf.mxu0
  %v753 = vadd.f32 %v565, %v752
  %v754 = vpop.f32.mrf.mxu0
  %v755 = vadd.f32 %v569, %v754
  %756 = vmatprep.mubr.f32.mxu0 %v473
  %757 = vmatmul.mubr.f32.gmra.mxu0 %v472
  %v758 = vpop.f32.mrf.mxu0
  %v759 = vadd.f32 %v565, %v758
  %v760 = vpop.f32.mrf.mxu0
  %v761 = vadd.f32 %v569, %v760
  %762 = vmatprep.mubr.f32.mxu0 %v475
  %763 = vmatmul.mubr.f32.gmra.mxu0 %v474
  %v764 = vpop.f32.mrf.mxu0
  %v765 = vadd.f32 %v565, %v764
  %v766 = vpop.f32.mrf.mxu0
  %v767 = vadd.f32 %v569, %v766
  %768 = vmatprep.mubr.f32.mxu0 %v477
  %769 = vmatmul.mubr.f32.gmra.mxu0 %v476
  %v770 = vpop.f32.mrf.mxu0
  %v771 = vadd.f32 %v565, %v770
  %v772 = vpop.f32.mrf.mxu0
  %v773 = vadd.f32 %v569, %v772
  %774 = vmatprep.mubr.f32.mxu0 %v479
  %775 = vmatmul.mubr.f32.gmra.mxu0 %v478
  %v776 = vpop.f32.mrf.mxu0
  %v777 = vadd.f32 %v565, %v776
  %v778 = vpop.f32.mrf.mxu0
  %v779 = vadd.f32 %v569, %v778
  %780 = vmatprep.mubr.f32.mxu0 %v481
  %781 = vmatmul.mubr.f32.gmra.mxu0 %v480
  %v782 = vpop.f32.mrf.mxu0
  %v783 = vadd.f32 %v565, %v782
  %v784 = vpop.f32.mrf.mxu0
  %v785 = vadd.f32 %v569, %v784
  %786 = vmatprep.mubr.f32.mxu0 %v483
  %787 = vmatmul.mubr.f32.gmra.mxu0 %v482
  %v788 = vpop.f32.mrf.mxu0
  %v789 = vadd.f32 %v565, %v788
  %v790 = vpop.f32.mrf.mxu0
  %v791 = vadd.f32 %v569, %v790
  %792 = vmatprep.mubr.f32.mxu0 %v485
  %793 = vmatmul.mubr.f32.gmra.mxu0 %v484
  %v794 = vpop.f32.mrf.mxu0
  %v795 = vadd.f32 %v565, %v794
  %v796 = vpop.f32.mrf.mxu0
  %v797 = vadd.f32 %v569, %v796
  %798 = vmatprep.mubr.f32.mxu0 %v487
  %799 = vmatmul.mubr.f32.gmra.mxu0 %v486
  %v800 = vpop.f32.mrf.mxu0
  %v801 = vadd.f32 %v565, %v800
  %v802 = vpop.f32.mrf.mxu0
  %v803 = vadd.f32 %v569, %v802
  %804 = vmatprep.mubr.f32.mxu0 %v489
  %805 = vmatmul.mubr.f32.gmra.mxu0 %v488
  %v806 = vpop.f32.mrf.mxu0
  %v807 = vadd.f32 %v565, %v806
  %v808 = vpop.f32.mrf.mxu0
  %v809 = vadd.f32 %v569, %v808
  %810 = vmatprep.mubr.f32.mxu0 %v491
  %811 = vmatmul.mubr.f32.gmra.mxu0 %v490
  %v812 = vpop.f32.mrf.mxu0
  %v813 = vadd.f32 %v565, %v812
  %v814 = vpop.f32.mrf.mxu0
  %v815 = vadd.f32 %v569, %v814
  %816 = vmatprep.mubr.f32.mxu0 %v493
  %817 = vmatmul.mubr.f32.gmra.mxu0 %v492
  %v818 = vpop.f32.mrf.mxu0
  %v819 = vadd.f32 %v565, %v818
  %v820 = vpop.f32.mrf.mxu0
  %v821 = vadd.f32 %v569, %v820
  %822 = vmatprep.mubr.f32.mxu0 %v495
  %823 = vmatmul.mubr.f32.gmra.mxu0 %v494
  %v824 = vpop.f32.mrf.mxu0
  %v825 = vadd.f32 %v565, %v824
  %v826 = vpop.f32.mrf.mxu0
  %v827 = vadd.f32 %v569, %v826
  %828 = vdwg.mxu0
  %v829 = vmax.f32 %v639, 0.0
  %v830 = vmax.f32 %v641, 0.0
  %v831 = vmax.f32 %v645, 0.0
  %v832 = vmax.f32 %v647, 0.0
  %v833 = vmax.f32 %v651, 0.0
  %v834 = vmax.f32 %v653, 0.0
  %v835 = vmax.f32 %v657, 0.0
  %v836 = vmax.f32 %v659, 0.0
  %v837 = vmax.f32 %v663, 0.0
  %v838 = vmax.f32 %v665, 0.0
  %v839 = vmax.f32 %v669, 0.0
  %v840 = vmax.f32 %v671, 0.0
  %v841 = vmax.f32 %v675, 0.0
  %v842 = vmax.f32 %v677, 0.0
  %v843 = vmax.f32 %v681, 0.0
  %v844 = vmax.f32 %v683, 0.0
  %v845 = vmax.f32 %v687, 0.0
  %v846 = vmax.f32 %v689, 0.0
  %v847 = vmax.f32 %v693, 0.0
  %v848 = vmax.f32 %v695, 0.0
  %v849 = vmax.f32 %v699, 0.0
  %v850 = vmax.f32 %v701, 0.0
  %v851 = vmax.f32 %v705, 0.0
  %v852 = vmax.f32 %v707, 0.0
  %v853 = vmax.f32 %v711, 0.0
  %v854 = vmax.f32 %v713, 0.0
  %v855 = vmax.f32 %v717, 0.0
  %v856 = vmax.f32 %v719, 0.0
  %v857 = vmax.f32 %v723, 0.0
  %v858 = vmax.f32 %v725, 0.0
  %v859 = vmax.f32 %v729, 0.0
  %v860 = vmax.f32 %v731, 0.0
  %v861 = vmax.f32 %v735, 0.0
  %v862 = vmax.f32 %v737, 0.0
  %v863 = vmax.f32 %v741, 0.0
  %v864 = vmax.f32 %v743, 0.0
  %v865 = vmax.f32 %v747, 0.0
  %v866 = vmax.f32 %v749, 0.0
  %v867 = vmax.f32 %v753, 0.0
  %v868 = vmax.f32 %v755, 0.0
  %v869 = vmax.f32 %v759, 0.0
  %v870 = vmax.f32 %v761, 0.0
  %v871 = vmax.f32 %v765, 0.0
  %v872 = vmax.f32 %v767, 0.0
  %v873 = vmax.f32 %v771, 0.0
  %v874 = vmax.f32 %v773, 0.0
  %v875 = vmax.f32 %v777, 0.0
  %v876 = vmax.f32 %v779, 0.0
  %v877 = vmax.f32 %v783, 0.0
  %v878 = vmax.f32 %v785, 0.0
  %v879 = vmax.f32 %v789, 0.0
  %v880 = vmax.f32 %v791, 0.0
  %v881 = vmax.f32 %v795, 0.0
  %v882 = vmax.f32 %v797, 0.0
  %v883 = vmax.f32 %v801, 0.0
  %v884 = vmax.f32 %v803, 0.0
  %v885 = vmax.f32 %v807, 0.0
  %v886 = vmax.f32 %v809, 0.0
  %v887 = vmax.f32 %v813, 0.0
  %v888 = vmax.f32 %v815, 0.0
  %v889 = vmax.f32 %v819, 0.0
  %v890 = vmax.f32 %v821, 0.0
  %v891 = vmax.f32 %v825, 0.0
  %v892 = vmax.f32 %v827, 0.0
  %v893 = vld [vmem:[%s5] sm:$0xff]
  %v894 = vld [vmem:[%s5 + $0x8] sm:$0xff]
  %v895 = vld [vmem:[%s5 + $0x10] sm:$0xff]
  %v896 = vld [vmem:[%s5 + $0x18] sm:$0xff]
  %v897 = vld [vmem:[%s5 + $0x20] sm:$0xff]
  %v898 = vld [vmem:[%s5 + $0x28] sm:$0xff]
  %v899 = vld [vmem:[%s5 + $0x30] sm:$0xff]
  %v900 = vld [vmem:[%s5 + $0x38] sm:$0xff]
  %v901 = vld [vmem:[%s5 + $0x40] sm:$0xff]
  %v902 = vld [vmem:[%s5 + $0x48] sm:$0xff]
  %v903 = vld [vmem:[%s5 + $0x50] sm:$0xff]
  %v904 = vld [vmem:[%s5 + $0x58] sm:$0xff]
  %v905 = vld [vmem:[%s5 + $0x60] sm:$0xff]
  %v906 = vld [vmem:[%s5 + $0x68] sm:$0xff]
  %v907 = vld [vmem:[%s5 + $0x70] sm:$0xff]
  %v908 = vld [vmem:[%s5 + $0x78] sm:$0xff]
  %v909 = vld [vmem:[%s5 + $0x80] sm:$0xff]
  %v910 = vld [vmem:[%s5 + $0x88] sm:$0xff]
  %v911 = vld [vmem:[%s5 + $0x90] sm:$0xff]
  %v912 = vld [vmem:[%s5 + $0x98] sm:$0xff]
  %v913 = vld [vmem:[%s5 + $0xa0] sm:$0xff]
  %v914 = vld [vmem:[%s5 + $0xa8] sm:$0xff]
  %v915 = vld [vmem:[%s5 + $0xb0] sm:$0xff]
  %v916 = vld [vmem:[%s5 + $0xb8] sm:$0xff]
  %v917 = vld [vmem:[%s5 + $0xc0] sm:$0xff]
  %v918 = vld [vmem:[%s5 + $0xc8] sm:$0xff]
  %v919 = vld [vmem:[%s5 + $0xd0] sm:$0xff]
  %v920 = vld [vmem:[%s5 + $0xd8] sm:$0xff]
  %v921 = vld [vmem:[%s5 + $0xe0] sm:$0xff]
  %v922 = vld [vmem:[%s5 + $0xe8] sm:$0xff]
  %v923 = vld [vmem:[%s5 + $0xf0] sm:$0xff]
  %v924 = vld [vmem:[%s5 + $0xf8] sm:$0xff]
  %v925 = vld [vmem:[%s6] sm:$0x1]
  %v927 = vlaneseq
  %v928 = vshrl.u32 %v927, 7
  %v929 = vsub.s32 0, %v928
  %v930 = vrot.slane %v925, %v929
  %932 = vmatprep.subr.mxu0 0.0
  %933 = vmatpush1.msra.mxu0 %v908
  %934 = vmatprep.subr.mxu0 0.0
  %935 = vmatpush1.msra.mxu0 %v907
  %936 = vmatprep.subr.mxu0 0.0
  %937 = vmatpush1.msra.mxu0 %v906
  %938 = vmatprep.subr.mxu0 0.0
  %939 = vmatpush1.msra.mxu0 %v905
  %940 = vmatprep.subr.mxu0 0.0
  %941 = vmatpush1.msra.mxu0 %v904
  %942 = vmatprep.subr.mxu0 0.0
  %943 = vmatpush1.msra.mxu0 %v903
  %944 = vmatprep.subr.mxu0 0.0
  %945 = vmatpush1.msra.mxu0 %v902
  %946 = vmatprep.subr.mxu0 0.0
  %947 = vmatpush1.msra.mxu0 %v901
  %948 = vmatprep.subr.mxu0 0.0
  %949 = vmatpush1.msra.mxu0 %v900
  %950 = vmatprep.subr.mxu0 0.0
  %951 = vmatpush1.msra.mxu0 %v899
  %952 = vmatprep.subr.mxu0 0.0
  %953 = vmatpush1.msra.mxu0 %v898
  %954 = vmatprep.subr.mxu0 0.0
  %955 = vmatpush1.msra.mxu0 %v897
  %956 = vmatprep.subr.mxu0 0.0
  %957 = vmatpush1.msra.mxu0 %v896
  %958 = vmatprep.subr.mxu0 0.0
  %959 = vmatpush1.msra.mxu0 %v895
  %960 = vmatprep.subr.mxu0 0.0
  %961 = vmatpush1.msra.mxu0 %v894
  %962 = vmatprep.subr.mxu0 0.0
  %963 = vmatpush1.msra.mxu0 %v893
  %964 = vmatprep.subr.mxu0 0.0
  %965 = vmatpush2.msra.mxu0 %v924
  %966 = vmatprep.subr.mxu0 0.0
  %967 = vmatpush2.msra.mxu0 %v923
  %968 = vmatprep.subr.mxu0 0.0
  %969 = vmatpush2.msra.mxu0 %v922
  %970 = vmatprep.subr.mxu0 0.0
  %971 = vmatpush2.msra.mxu0 %v921
  %972 = vmatprep.subr.mxu0 0.0
  %973 = vmatpush2.msra.mxu0 %v920
  %974 = vmatprep.subr.mxu0 0.0
  %975 = vmatpush2.msra.mxu0 %v919
  %976 = vmatprep.subr.mxu0 0.0
  %977 = vmatpush2.msra.mxu0 %v918
  %978 = vmatprep.subr.mxu0 0.0
  %979 = vmatpush2.msra.mxu0 %v917
  %980 = vmatprep.subr.mxu0 0.0
  %981 = vmatpush2.msra.mxu0 %v916
  %982 = vmatprep.subr.mxu0 0.0
  %983 = vmatpush2.msra.mxu0 %v915
  %984 = vmatprep.subr.mxu0 0.0
  %985 = vmatpush2.msra.mxu0 %v914
  %986 = vmatprep.subr.mxu0 0.0
  %987 = vmatpush2.msra.mxu0 %v913
  %988 = vmatprep.subr.mxu0 0.0
  %989 = vmatpush2.msra.mxu0 %v912
  %990 = vmatprep.subr.mxu0 0.0
  %991 = vmatpush2.msra.mxu0 %v911
  %992 = vmatprep.subr.mxu0 0.0
  %993 = vmatpush2.msra.mxu0 %v910
  %994 = vmatprep.subr.mxu0 0.0
  %995 = vmatpush2.msra.mxu0 %v909
  %996 = vmatprep.mubr.f32.mxu0 %v830
  %997 = vmatmul.mubr.f32.gmra.mxu0 %v829
  %v998 = vpop.f32.mrf.mxu0
  %v999 = vadd.f32 %v930, %v998
  %v1000 = vpop.f32.mrf.mxu0
  %1001 = vmatprep.mubr.f32.mxu0 %v832
  %1002 = vmatmul.mubr.f32.gmra.mxu0 %v831
  %v1003 = vpop.f32.mrf.mxu0
  %v1004 = vadd.f32 %v930, %v1003
  %v1005 = vpop.f32.mrf.mxu0
  %1006 = vmatprep.mubr.f32.mxu0 %v834
  %1007 = vmatmul.mubr.f32.gmra.mxu0 %v833
  %v1008 = vpop.f32.mrf.mxu0
  %v1009 = vadd.f32 %v930, %v1008
  %v1010 = vpop.f32.mrf.mxu0
  %1011 = vmatprep.mubr.f32.mxu0 %v836
  %1012 = vmatmul.mubr.f32.gmra.mxu0 %v835
  %v1013 = vpop.f32.mrf.mxu0
  %v1014 = vadd.f32 %v930, %v1013
  %v1015 = vpop.f32.mrf.mxu0
  %1016 = vmatprep.mubr.f32.mxu0 %v838
  %1017 = vmatmul.mubr.f32.gmra.mxu0 %v837
  %v1018 = vpop.f32.mrf.mxu0
  %v1019 = vadd.f32 %v930, %v1018
  %v1020 = vpop.f32.mrf.mxu0
  %1021 = vmatprep.mubr.f32.mxu0 %v840
  %1022 = vmatmul.mubr.f32.gmra.mxu0 %v839
  %v1023 = vpop.f32.mrf.mxu0
  %v1024 = vadd.f32 %v930, %v1023
  %v1025 = vpop.f32.mrf.mxu0
  %1026 = vmatprep.mubr.f32.mxu0 %v842
  %1027 = vmatmul.mubr.f32.gmra.mxu0 %v841
  %v1028 = vpop.f32.mrf.mxu0
  %v1029 = vadd.f32 %v930, %v1028
  %v1030 = vpop.f32.mrf.mxu0
  %1031 = vmatprep.mubr.f32.mxu0 %v844
  %1032 = vmatmul.mubr.f32.gmra.mxu0 %v843
  %v1033 = vpop.f32.mrf.mxu0
  %v1034 = vadd.f32 %v930, %v1033
  %v1035 = vpop.f32.mrf.mxu0
  %1036 = vmatprep.mubr.f32.mxu0 %v846
  %1037 = vmatmul.mubr.f32.gmra.mxu0 %v845
  %v1038 = vpop.f32.mrf.mxu0
  %v1039 = vadd.f32 %v930, %v1038
  %v1040 = vpop.f32.mrf.mxu0
  %1041 = vmatprep.mubr.f32.mxu0 %v848
  %1042 = vmatmul.mubr.f32.gmra.mxu0 %v847
  %v1043 = vpop.f32.mrf.mxu0
  %v1044 = vadd.f32 %v930, %v1043
  %v1045 = vpop.f32.mrf.mxu0
  %1046 = vmatprep.mubr.f32.mxu0 %v850
  %1047 = vmatmul.mubr.f32.gmra.mxu0 %v849
  %v1048 = vpop.f32.mrf.mxu0
  %v1049 = vadd.f32 %v930, %v1048
  %v1050 = vpop.f32.mrf.mxu0
  %1051 = vmatprep.mubr.f32.mxu0 %v852
  %1052 = vmatmul.mubr.f32.gmra.mxu0 %v851
  %v1053 = vpop.f32.mrf.mxu0
  %v1054 = vadd.f32 %v930, %v1053
  %v1055 = vpop.f32.mrf.mxu0
  %1056 = vmatprep.mubr.f32.mxu0 %v854
  %1057 = vmatmul.mubr.f32.gmra.mxu0 %v853
  %v1058 = vpop.f32.mrf.mxu0
  %v1059 = vadd.f32 %v930, %v1058
  %v1060 = vpop.f32.mrf.mxu0
  %1061 = vmatprep.mubr.f32.mxu0 %v856
  %1062 = vmatmul.mubr.f32.gmra.mxu0 %v855
  %v1063 = vpop.f32.mrf.mxu0
  %v1064 = vadd.f32 %v930, %v1063
  %v1065 = vpop.f32.mrf.mxu0
  %1066 = vmatprep.mubr.f32.mxu0 %v858
  %1067 = vmatmul.mubr.f32.gmra.mxu0 %v857
  %v1068 = vpop.f32.mrf.mxu0
  %v1069 = vadd.f32 %v930, %v1068
  %v1070 = vpop.f32.mrf.mxu0
  %1071 = vmatprep.mubr.f32.mxu0 %v860
  %1072 = vmatmul.mubr.f32.gmra.mxu0 %v859
  %v1073 = vpop.f32.mrf.mxu0
  %v1074 = vadd.f32 %v930, %v1073
  %v1075 = vpop.f32.mrf.mxu0
  %1076 = vmatprep.mubr.f32.mxu0 %v862
  %1077 = vmatmul.mubr.f32.gmra.mxu0 %v861
  %v1078 = vpop.f32.mrf.mxu0
  %v1079 = vadd.f32 %v930, %v1078
  %v1080 = vpop.f32.mrf.mxu0
  %1081 = vmatprep.mubr.f32.mxu0 %v864
  %1082 = vmatmul.mubr.f32.gmra.mxu0 %v863
  %v1083 = vpop.f32.mrf.mxu0
  %v1084 = vadd.f32 %v930, %v1083
  %v1085 = vpop.f32.mrf.mxu0
  %1086 = vmatprep.mubr.f32.mxu0 %v866
  %1087 = vmatmul.mubr.f32.gmra.mxu0 %v865
  %v1088 = vpop.f32.mrf.mxu0
  %v1089 = vadd.f32 %v930, %v1088
  %v1090 = vpop.f32.mrf.mxu0
  %1091 = vmatprep.mubr.f32.mxu0 %v868
  %1092 = vmatmul.mubr.f32.gmra.mxu0 %v867
  %v1093 = vpop.f32.mrf.mxu0
  %v1094 = vadd.f32 %v930, %v1093
  %v1095 = vpop.f32.mrf.mxu0
  %1096 = vmatprep.mubr.f32.mxu0 %v870
  %1097 = vmatmul.mubr.f32.gmra.mxu0 %v869
  %v1098 = vpop.f32.mrf.mxu0
  %v1099 = vadd.f32 %v930, %v1098
  %v1100 = vpop.f32.mrf.mxu0
  %1101 = vmatprep.mubr.f32.mxu0 %v872
  %1102 = vmatmul.mubr.f32.gmra.mxu0 %v871
  %v1103 = vpop.f32.mrf.mxu0
  %v1104 = vadd.f32 %v930, %v1103
  %v1105 = vpop.f32.mrf.mxu0
  %1106 = vmatprep.mubr.f32.mxu0 %v874
  %1107 = vmatmul.mubr.f32.gmra.mxu0 %v873
  %v1108 = vpop.f32.mrf.mxu0
  %v1109 = vadd.f32 %v930, %v1108
  %v1110 = vpop.f32.mrf.mxu0
  %1111 = vmatprep.mubr.f32.mxu0 %v876
  %1112 = vmatmul.mubr.f32.gmra.mxu0 %v875
  %v1113 = vpop.f32.mrf.mxu0
  %v1114 = vadd.f32 %v930, %v1113
  %v1115 = vpop.f32.mrf.mxu0
  %1116 = vmatprep.mubr.f32.mxu0 %v878
  %1117 = vmatmul.mubr.f32.gmra.mxu0 %v877
  %v1118 = vpop.f32.mrf.mxu0
  %v1119 = vadd.f32 %v930, %v1118
  %v1120 = vpop.f32.mrf.mxu0
  %1121 = vmatprep.mubr.f32.mxu0 %v880
  %1122 = vmatmul.mubr.f32.gmra.mxu0 %v879
  %v1123 = vpop.f32.mrf.mxu0
  %v1124 = vadd.f32 %v930, %v1123
  %v1125 = vpop.f32.mrf.mxu0
  %1126 = vmatprep.mubr.f32.mxu0 %v882
  %1127 = vmatmul.mubr.f32.gmra.mxu0 %v881
  %v1128 = vpop.f32.mrf.mxu0
  %v1129 = vadd.f32 %v930, %v1128
  %v1130 = vpop.f32.mrf.mxu0
  %1131 = vmatprep.mubr.f32.mxu0 %v884
  %1132 = vmatmul.mubr.f32.gmra.mxu0 %v883
  %v1133 = vpop.f32.mrf.mxu0
  %v1134 = vadd.f32 %v930, %v1133
  %v1135 = vpop.f32.mrf.mxu0
  %1136 = vmatprep.mubr.f32.mxu0 %v886
  %1137 = vmatmul.mubr.f32.gmra.mxu0 %v885
  %v1138 = vpop.f32.mrf.mxu0
  %v1139 = vadd.f32 %v930, %v1138
  %v1140 = vpop.f32.mrf.mxu0
  %1141 = vmatprep.mubr.f32.mxu0 %v888
  %1142 = vmatmul.mubr.f32.gmra.mxu0 %v887
  %v1143 = vpop.f32.mrf.mxu0
  %v1144 = vadd.f32 %v930, %v1143
  %v1145 = vpop.f32.mrf.mxu0
  %1146 = vmatprep.mubr.f32.mxu0 %v890
  %1147 = vmatmul.mubr.f32.gmra.mxu0 %v889
  %v1148 = vpop.f32.mrf.mxu0
  %v1149 = vadd.f32 %v930, %v1148
  %v1150 = vpop.f32.mrf.mxu0
  %1151 = vmatprep.mubr.f32.mxu0 %v892
  %1152 = vmatmul.mubr.f32.gmra.mxu0 %v891
  %v1153 = vpop.f32.mrf.mxu0
  %v1154 = vadd.f32 %v930, %v1153
  %v1155 = vpop.f32.mrf.mxu0
  %1156 = vdwg.mxu0
  %vm1157 = vcmask 64512
  %1158 = vst.msk [vmem:[%s7] sm:$0xff] %vm1157, %v999
  %1159 = vst.msk [vmem:[%s7 + $0x8] sm:$0xff] %vm1157, %v1004
  %1160 = vst.msk [vmem:[%s7 + $0x10] sm:$0xff] %vm1157, %v1009
  %1161 = vst.msk [vmem:[%s7 + $0x18] sm:$0xff] %vm1157, %v1014
  %1162 = vst.msk [vmem:[%s7 + $0x20] sm:$0xff] %vm1157, %v1019
  %1163 = vst.msk [vmem:[%s7 + $0x28] sm:$0xff] %vm1157, %v1024
  %1164 = vst.msk [vmem:[%s7 + $0x30] sm:$0xff] %vm1157, %v1029
  %1165 = vst.msk [vmem:[%s7 + $0x38] sm:$0xff] %vm1157, %v1034
  %1166 = vst.msk [vmem:[%s7 + $0x40] sm:$0xff] %vm1157, %v1039
  %1167 = vst.msk [vmem:[%s7 + $0x48] sm:$0xff] %vm1157, %v1044
  %1168 = vst.msk [vmem:[%s7 + $0x50] sm:$0xff] %vm1157, %v1049
  %1169 = vst.msk [vmem:[%s7 + $0x58] sm:$0xff] %vm1157, %v1054
  %1170 = vst.msk [vmem:[%s7 + $0x60] sm:$0xff] %vm1157, %v1059
  %1171 = vst.msk [vmem:[%s7 + $0x68] sm:$0xff] %vm1157, %v1064
  %1172 = vst.msk [vmem:[%s7 + $0x70] sm:$0xff] %vm1157, %v1069
  %1173 = vst.msk [vmem:[%s7 + $0x78] sm:$0xff] %vm1157, %v1074
  %1174 = vst.msk [vmem:[%s7 + $0x80] sm:$0xff] %vm1157, %v1079
  %1175 = vst.msk [vmem:[%s7 + $0x88] sm:$0xff] %vm1157, %v1084
  %1176 = vst.msk [vmem:[%s7 + $0x90] sm:$0xff] %vm1157, %v1089
  %1177 = vst.msk [vmem:[%s7 + $0x98] sm:$0xff] %vm1157, %v1094
  %1178 = vst.msk [vmem:[%s7 + $0xa0] sm:$0xff] %vm1157, %v1099
  %1179 = vst.msk [vmem:[%s7 + $0xa8] sm:$0xff] %vm1157, %v1104
  %1180 = vst.msk [vmem:[%s7 + $0xb0] sm:$0xff] %vm1157, %v1109
  %1181 = vst.msk [vmem:[%s7 + $0xb8] sm:$0xff] %vm1157, %v1114
  %1182 = vst.msk [vmem:[%s7 + $0xc0] sm:$0xff] %vm1157, %v1119
  %1183 = vst.msk [vmem:[%s7 + $0xc8] sm:$0xff] %vm1157, %v1124
  %1184 = vst.msk [vmem:[%s7 + $0xd0] sm:$0xff] %vm1157, %v1129
  %1185 = vst.msk [vmem:[%s7 + $0xd8] sm:$0xff] %vm1157, %v1134
  %1186 = vst.msk [vmem:[%s7 + $0xe0] sm:$0xff] %vm1157, %v1139
  %1187 = vst.msk [vmem:[%s7 + $0xe8] sm:$0xff] %vm1157, %v1144
  %1188 = vst.msk [vmem:[%s7 + $0xf0] sm:$0xff] %vm1157, %v1149
  %1189 = vst.msk [vmem:[%s7 + $0xf8] sm:$0xff] %vm1157, %v1154
  // Predicated region
  $region30: #{tpu_custom_call.1} parent=0 // pred_check
    _
  $region31: #{tpu_custom_call.1} parent=0 // pred_check_branch
    %1191 = sbr.rel (0) target = $region33
  $region32: #{tpu_custom_call.1} parent=0 // pred_region
    _
  $region33: #{tpu_custom_call.1} parent=0 // pred_fallthru
    _
  // Predicated region
  $region34: #{tpu_custom_call.1} parent=0 // pred_check
    _
  $region35: #{tpu_custom_call.1} parent=0 // pred_check_branch
    %1193 = sbr.rel (0) target = $region37
  $region36: #{tpu_custom_call.1} parent=0 // pred_region
    _
  $region37: #{tpu_custom_call.1} parent=0 // pred_fallthru
    _

</llo_original>
